<compile_context>
chip_gen: v7x
topology: tpu7x:2x2x1
jax: 0.10.0
libtpu: 0.0.40
codegen_flags: <defaults>
</compile_context>

<pallas_src>
import functools

import jax
import jax.numpy as jnp
from jax.experimental import pallas as pl
from jax.experimental.pallas import tpu as pltpu

_MIB = 1024 * 1024


def _round_up(x, m):
    return ((x + m - 1) // m) * m


def get_chip_config():
    """Per-generation tile sizes / VMEM budget.
    v5e : tm=256  tf=1024  vmem~100MiB (needs ~240 flops/weight-byte; 128 MiB VMEM)
    v6e : tm=512  tf=512   vmem~100MiB (needs ~680 flops/weight-byte -> bigger tm)
    v7x : tm=384  tf=256   vmem~52MiB  (only ~310 flops/byte needed; 64 MiB VMEM)
    cast_x: pre-cast activations to bf16 in the wrapper only where VMEM is the
    binder (v7x); elsewhere pass fp32 and cast in-kernel to skip an HBM pass."""
    try:
        kind = jax.devices()[0].device_kind.lower()
    except Exception:
        kind = ""
    if "v7" in kind:
        return dict(tm=384, tf=256, vmem_limit=52 * _MIB, cast_x=True)
    if "v6" in kind or "trillium" in kind:
        return dict(tm=512, tf=512, vmem_limit=100 * _MIB, cast_x=False)
    if "v5 lite" in kind or "v5e" in kind or "v5lite" in kind:
        return dict(tm=256, tf=1024, vmem_limit=100 * _MIB, cast_x=False)
    # Unknown / older chip: conservative tiles, keep the default scoped VMEM.
    return dict(tm=256, tf=512, vmem_limit=None, cast_x=False)


def _mlp_kernel(x_ref, w1t_ref, b1_ref, w2t_ref, o_ref, *, n_sub):
    # x_ref:   (tm, H)  fp32 or bf16 tile of flattened hidden_states
    # w1t_ref: (H, tf)  bf16 column block of W1^T
    # b1_ref:  (1, tf)  fp32 bias block of dense_h_to_4h
    # w2t_ref: (tf, H)  bf16 row block of W2^T
    # o_ref:   (tm, H)  fp32 output tile, resident across the F axis (accumulator)
    f = pl.program_id(1)

    @pl.when(f == 0)
    def _():
        o_ref[...] = jnp.zeros_like(o_ref)

    # Cast the activation tile once (no-op if the wrapper already cast to bf16).
    xb = x_ref[...].astype(jnp.bfloat16)

    tf_blk = w1t_ref.shape[1]
    sub = tf_blk // n_sub
    # Static unroll over sub-chunks: matmul1 of chunk s+1 is independent of the
    # GeLU / matmul2 of chunk s, so the scheduler can keep the MXU busy.
    for s in range(n_sub):
        sl = pl.ds(s * sub, sub)
        # dense_h_to_4h block: bf16 operands on the MXU, fp32 accumulation.
        h = jnp.dot(xb, w1t_ref[:, sl], preferred_element_type=jnp.float32)
        # Fused bias + tanh GeLU in fp32 (matches torch.jit bias_gelu constants).
        z = h + b1_ref[:, sl]
        g = z * 0.5 * (1.0 + jnp.tanh(0.79788456 * z * (1.0 + 0.044715 * z * z)))
        # dense_4h_to_h partial product, accumulated into the resident output tile.
        o_ref[...] += jnp.dot(g.astype(jnp.bfloat16), w2t_ref[sl, :],
                              preferred_element_type=jnp.float32)


def prepare_weights(w1, b1, w2, *, tf):
    """One-time weight prep (do this OUTSIDE the per-step jit): transpose to a
    matmul-friendly layout, cast to bf16 for the MXU, and zero-pad the FFN axis
    to a multiple of the F tile so the kernel never loads a full HxF block."""
    F, H = w1.shape
    tf_eff = min(tf, _round_up(F, 256))      # keep sub-chunks >= 128 lanes
    F_pad = _round_up(F, tf_eff)
    w1t = jnp.asarray(w1.T, dtype=jnp.bfloat16)                # (H, F)
    w2t = jnp.asarray(w2.T, dtype=jnp.bfloat16)                # (F, H)
    b1r = jnp.asarray(b1, dtype=jnp.float32).reshape(1, -1)    # (1, F)
    if F_pad != F:
        pad = F_pad - F
        w1t = jnp.pad(w1t, ((0, 0), (0, pad)))
        w2t = jnp.pad(w2t, ((0, pad), (0, 0)))
        b1r = jnp.pad(b1r, ((0, 0), (0, pad)))
    return w1t, b1r, w2t, tf_eff


@functools.partial(
    jax.jit, static_argnames=("tm", "tf", "vmem_limit", "cast_x", "n_sub"))
def parallel_mlp_forward(hidden_states, w1t, b1r, w2t, b2, *,
                         tm, tf, vmem_limit=None, cast_x=False, n_sub=2):
    """hidden_states: [B, S, H] float32.
    w1t: [H, F_pad] bf16, b1r: [1, F_pad] fp32, w2t: [F_pad, H] bf16
    (all from prepare_weights). Returns (output [B, S, H] fp32, output_bias [H])."""
    B, S, H = hidden_states.shape
    F_pad = w1t.shape[1]
    assert F_pad % tf == 0, "prepare_weights() must pad F to a multiple of tf"
    M = B * S

    # Row tile: clamp for small M; multiples of 16 for full bf16 sublane packing.
    tm_eff = min(tm, _round_up(M, 16))
    # Megacore / 2-TC chips: if all rows fit one tile but there is enough work,
    # split into two M tiles so both cores get one (instead of padding M up).
    if M <= tm_eff and M > 256:
        tm_eff = _round_up((M + 1) // 2, 16)
    M_pad = _round_up(M, tm_eff)

    n_sub_eff = n_sub if (n_sub > 0 and tf % (128 * n_sub) == 0) else 1

    x = hidden_states.reshape(M, H)
    if cast_x:
        x = x.astype(jnp.bfloat16)      # only where VMEM is the binder (v7x)
    if M_pad != M:
        x = jnp.pad(x, ((0, M_pad - M), (0, 0)))

    n_m = M_pad // tm_eff
    grid = (n_m, F_pad // tf)

    x_bytes = 2 if cast_x else 4
    cost = pl.CostEstimate(
        flops=4 * M_pad * H * F_pad,                       # two matmuls
        transcendentals=M_pad * F_pad,                     # tanh per intermediate
        bytes_accessed=(M_pad * H * x_bytes                # activations read
                        + n_m * (w1t.size + w2t.size) * 2  # weights re-streamed / M tile
                        + n_m * b1r.size * 4
                        + M_pad * H * 4),                  # output write
    )

    cp_kwargs = dict(dimension_semantics=("parallel", "arbitrary"))
    if vmem_limit is not None:
        cp_kwargs["vmem_limit_bytes"] = int(vmem_limit)

    out = pl.pallas_call(
        functools.partial(_mlp_kernel, n_sub=n_sub_eff),
        out_shape=jax.ShapeDtypeStruct((M_pad, H), jnp.float32),
        grid_spec=pltpu.PrefetchScalarGridSpec(
            num_scalar_prefetch=0,
            grid=grid,
            in_specs=[
                pl.BlockSpec((tm_eff, H), lambda i, f: (i, 0)),   # x tile
                pl.BlockSpec((H, tf), lambda i, f: (0, f)),       # W1^T column block
                pl.BlockSpec((1, tf), lambda i, f: (0, f)),       # b1 block
                pl.BlockSpec((tf, H), lambda i, f: (f, 0)),       # W2^T row block
            ],
            # Same block for every f -> output tile stays resident and acts as
            # the fp32 accumulator (no separate scratch needed).
            out_specs=pl.BlockSpec((tm_eff, H), lambda i, f: (i, 0)),
        ),
        compiler_params=pltpu.CompilerParams(**cp_kwargs),
        cost_estimate=cost,
    )(x, w1t, b1r, w2t)

    out = out[:M].reshape(B, S, H)
    # skip_bias_add=True on dense_4h_to_h -> bias is returned, not added.
    # TODO(synk): tensor-parallel collectives (scatter/all-reduce) are identity at
    # world_size==1 and are not implemented here.
    return out, b2


def init_params(key, hidden_size, ffn_hidden_size):
    k1, k2, k3, k4 = jax.random.split(key, 4)
    scale1 = 1.0 / jnp.sqrt(hidden_size)
    scale2 = 1.0 / jnp.sqrt(ffn_hidden_size)
    w1 = jax.random.normal(k1, (ffn_hidden_size, hidden_size), jnp.float32) * scale1
    b1 = jax.random.normal(k2, (ffn_hidden_size,), jnp.float32) * 0.01
    w2 = jax.random.normal(k3, (hidden_size, ffn_hidden_size), jnp.float32) * scale2
    b2 = jax.random.normal(k4, (hidden_size,), jnp.float32) * 0.01
    return w1, b1, w2, b2


def _reference(hidden_states, w1, b1, w2, b2):
    """Reference that mirrors the kernel's bf16-operand / fp32-accum numerics."""
    B, S, H = hidden_states.shape
    x = hidden_states.reshape(B * S, H).astype(jnp.bfloat16)
    h = jnp.dot(x, w1.T.astype(jnp.bfloat16), preferred_element_type=jnp.float32)
    z = h + b1.astype(jnp.float32)
    g = z * 0.5 * (1.0 + jnp.tanh(0.79788456 * z * (1.0 + 0.044715 * z * z)))
    out = jnp.dot(g.astype(jnp.bfloat16), w2.T.astype(jnp.bfloat16),
                  preferred_element_type=jnp.float32)
    return out.reshape(B, S, H), b2


if __name__ == "__main__":
    batch, seq, hidden, ffn = 2, 8, 32, 128  # ffn = 4*hidden

    key = jax.random.PRNGKey(0)
    kx, kp = jax.random.split(key)
    x = jax.random.normal(kx, (batch, seq, hidden), jnp.float32)
    w1, b1, w2, b2 = init_params(kp, hidden, ffn)

    cfg = get_chip_config()
    w1t, b1r, w2t, tf_eff = prepare_weights(w1, b1, w2, tf=cfg["tf"])
    out, out_bias = parallel_mlp_forward(
        x, w1t, b1r, w2t, b2,
        tm=cfg["tm"], tf=tf_eff, vmem_limit=cfg["vmem_limit"],
        cast_x=cfg["cast_x"], n_sub=2)
    out = jax.block_until_ready(out)
    out_bias = jax.block_until_ready(out_bias)

    ref_out, ref_bias = _reference(x, w1, b1, w2, b2)
    assert out.shape == (batch, seq, hidden)
    assert out_bias.shape == (hidden,)
    assert jnp.allclose(out, ref_out, atol=2e-3, rtol=2e-3)
    assert jnp.allclose(out_bias, ref_bias)

    print("KERNEL_OK")
</pallas_src>

<mosaic_0001>
module attributes {stable_mosaic.version = 11 : i64} {
  func.func @_mlp_kernel(%arg0: i32, %arg1: i32, %arg2: memref<16x32xf32, #tpu.memory_space<vmem>>, %arg3: memref<32x256xbf16, #tpu.memory_space<vmem>>, %arg4: memref<1x256xf32, #tpu.memory_space<vmem>>, %arg5: memref<256x32xbf16, #tpu.memory_space<vmem>>, %arg6: memref<16x32xf32, #tpu.memory_space<vmem>>) attributes {dimension_semantics = [#tpu.dimension_semantics<parallel>, #tpu.dimension_semantics<arbitrary>], iteration_bounds = array<i64: 1, 1>, scalar_prefetch = 0 : i64, scratch_operands = 0 : i64, tpu.core_type = #tpu.core_type<tc>, window_params = [{transform_indices = @transform_0, window_bounds = array<i64: 16, 32>}, {transform_indices = @transform_1, window_bounds = array<i64: 32, 256>}, {transform_indices = @transform_2, window_bounds = array<i64: 1, 256>}, {transform_indices = @transform_3, window_bounds = array<i64: 256, 32>}, {transform_indices = @transform_4, window_bounds = array<i64: 16, 32>}]} {
    %c0_i32 = arith.constant 0 : i32
    %0 = arith.cmpi eq, %arg1, %c0_i32 : i32
    %1 = arith.extui %0 : i1 to i32
    %c0_i32_0 = arith.constant 0 : i32
    %2 = arith.cmpi ne, %1, %c0_i32_0 : i32
    scf.if %2 {
      %cst_34 = arith.constant 0.000000e+00 : f32
      %55 = vector.broadcast %cst_34 : f32 to vector<16x32xf32>
      %c0_35 = arith.constant 0 : index
      %c0_36 = arith.constant 0 : index
      %56 = vector.load %arg6[%c0_35, %c0_36] : memref<16x32xf32, #tpu.memory_space<vmem>>, vector<16x32xf32>
      tpu.vector_store %arg6[%c0_35, %c0_36], %55 {strides = array<i32>} : memref<16x32xf32, #tpu.memory_space<vmem>>, vector<16x32xf32>,
    } else {
    }
    %c0 = arith.constant 0 : index
    %c0_1 = arith.constant 0 : index
    %3 = vector.load %arg2[%c0, %c0_1] : memref<16x32xf32, #tpu.memory_space<vmem>>, vector<16x32xf32>
    %4 = arith.truncf %3 : vector<16x32xf32> to vector<16x32xbf16>
    %c0_2 = arith.constant 0 : index
    %c0_3 = arith.constant 0 : index
    %5 = vector.load %arg3[%c0_2, %c0_3] : memref<32x256xbf16, #tpu.memory_space<vmem>>, vector<32x128xbf16>
    %cst = arith.constant dense<0.000000e+00> : vector<16x128xf32>
    %6 = tpu.matmul %4, %5, %cst {dimension_numbers = #tpu.dot_dimension_numbers<[1], [0], [0], [1], [0, 0, 1, 1], [], []>} : vector<16x32xbf16>, vector<32x128xbf16>, vector<16x128xf32> -> vector<16x128xf32>
    %c0_4 = arith.constant 0 : index
    %c0_5 = arith.constant 0 : index
    %7 = vector.load %arg4[%c0_4, %c0_5] : memref<1x256xf32, #tpu.memory_space<vmem>>, vector<1x128xf32>
    %8 = vector.broadcast %7 : vector<1x128xf32> to vector<16x128xf32>
    %9 = arith.addf %6, %8 : vector<16x128xf32>
    %cst_6 = arith.constant 5.000000e-01 : f32
    %10 = vector.broadcast %cst_6 : f32 to vector<16x128xf32>
    %11 = arith.mulf %9, %10 : vector<16x128xf32>
    %cst_7 = arith.constant 0.797884583 : f32
    %12 = vector.broadcast %cst_7 : f32 to vector<16x128xf32>
    %13 = arith.mulf %12, %9 : vector<16x128xf32>
    %cst_8 = arith.constant 4.471500e-02 : f32
    %14 = vector.broadcast %cst_8 : f32 to vector<16x128xf32>
    %15 = arith.mulf %14, %9 : vector<16x128xf32>
    %16 = arith.mulf %15, %9 : vector<16x128xf32>
    %cst_9 = arith.constant 1.000000e+00 : f32
    %17 = vector.broadcast %cst_9 : f32 to vector<16x128xf32>
    %18 = arith.addf %17, %16 : vector<16x128xf32>
    %19 = arith.mulf %13, %18 : vector<16x128xf32>
    %20 = math.tanh %19 : vector<16x128xf32>
    %cst_10 = arith.constant 1.000000e+00 : f32
    %21 = vector.broadcast %cst_10 : f32 to vector<16x128xf32>
    %22 = arith.addf %21, %20 : vector<16x128xf32>
    %23 = arith.mulf %11, %22 : vector<16x128xf32>
    %c0_11 = arith.constant 0 : index
    %c0_12 = arith.constant 0 : index
    %24 = vector.load %arg6[%c0_11, %c0_12] : memref<16x32xf32, #tpu.memory_space<vmem>>, vector<16x32xf32>
    %25 = arith.truncf %23 : vector<16x128xf32> to vector<16x128xbf16>
    %c0_13 = arith.constant 0 : index
    %c0_14 = arith.constant 0 : index
    %26 = vector.load %arg5[%c0_13, %c0_14] : memref<256x32xbf16, #tpu.memory_space<vmem>>, vector<128x32xbf16>
    %cst_15 = arith.constant dense<0.000000e+00> : vector<16x32xf32>
    %27 = tpu.matmul %25, %26, %cst_15 {dimension_numbers = #tpu.dot_dimension_numbers<[1], [0], [0], [1], [0, 0, 1, 1], [], []>} : vector<16x128xbf16>, vector<128x32xbf16>, vector<16x32xf32> -> vector<16x32xf32>
    %28 = arith.addf %24, %27 : vector<16x32xf32>
    %c0_16 = arith.constant 0 : index
    %c0_17 = arith.constant 0 : index
    %29 = vector.load %arg6[%c0_16, %c0_17] : memref<16x32xf32, #tpu.memory_space<vmem>>, vector<16x32xf32>
    tpu.vector_store %arg6[%c0_16, %c0_17], %28 {strides = array<i32>} : memref<16x32xf32, #tpu.memory_space<vmem>>, vector<16x32xf32>,
    %c0_18 = arith.constant 0 : index
    %c128 = arith.constant 128 : index
    %30 = vector.load %arg3[%c0_18, %c128] : memref<32x256xbf16, #tpu.memory_space<vmem>>, vector<32x128xbf16>
    %cst_19 = arith.constant dense<0.000000e+00> : vector<16x128xf32>
    %31 = tpu.matmul %4, %30, %cst_19 {dimension_numbers = #tpu.dot_dimension_numbers<[1], [0], [0], [1], [0, 0, 1, 1], [], []>} : vector<16x32xbf16>, vector<32x128xbf16>, vector<16x128xf32> -> vector<16x128xf32>
    %c0_20 = arith.constant 0 : index
    %c128_21 = arith.constant 128 : index
    %32 = vector.load %arg4[%c0_20, %c128_21] : memref<1x256xf32, #tpu.memory_space<vmem>>, vector<1x128xf32>
    %33 = vector.broadcast %32 : vector<1x128xf32> to vector<16x128xf32>
    %34 = arith.addf %31, %33 : vector<16x128xf32>
    %cst_22 = arith.constant 5.000000e-01 : f32
    %35 = vector.broadcast %cst_22 : f32 to vector<16x128xf32>
    %36 = arith.mulf %34, %35 : vector<16x128xf32>
    %cst_23 = arith.constant 0.797884583 : f32
    %37 = vector.broadcast %cst_23 : f32 to vector<16x128xf32>
    %38 = arith.mulf %37, %34 : vector<16x128xf32>
    %cst_24 = arith.constant 4.471500e-02 : f32
    %39 = vector.broadcast %cst_24 : f32 to vector<16x128xf32>
    %40 = arith.mulf %39, %34 : vector<16x128xf32>
    %41 = arith.mulf %40, %34 : vector<16x128xf32>
    %cst_25 = arith.constant 1.000000e+00 : f32
    %42 = vector.broadcast %cst_25 : f32 to vector<16x128xf32>
    %43 = arith.addf %42, %41 : vector<16x128xf32>
    %44 = arith.mulf %38, %43 : vector<16x128xf32>
    %45 = math.tanh %44 : vector<16x128xf32>
    %cst_26 = arith.constant 1.000000e+00 : f32
    %46 = vector.broadcast %cst_26 : f32 to vector<16x128xf32>
    %47 = arith.addf %46, %45 : vector<16x128xf32>
    %48 = arith.mulf %36, %47 : vector<16x128xf32>
    %c0_27 = arith.constant 0 : index
    %c0_28 = arith.constant 0 : index
    %49 = vector.load %arg6[%c0_27, %c0_28] : memref<16x32xf32, #tpu.memory_space<vmem>>, vector<16x32xf32>
    %50 = arith.truncf %48 : vector<16x128xf32> to vector<16x128xbf16>
    %c128_29 = arith.constant 128 : index
    %c0_30 = arith.constant 0 : index
    %51 = vector.load %arg5[%c128_29, %c0_30] : memref<256x32xbf16, #tpu.memory_space<vmem>>, vector<128x32xbf16>
    %cst_31 = arith.constant dense<0.000000e+00> : vector<16x32xf32>
    %52 = tpu.matmul %50, %51, %cst_31 {dimension_numbers = #tpu.dot_dimension_numbers<[1], [0], [0], [1], [0, 0, 1, 1], [], []>} : vector<16x128xbf16>, vector<128x32xbf16>, vector<16x32xf32> -> vector<16x32xf32>
    %53 = arith.addf %49, %52 : vector<16x32xf32>
    %c0_32 = arith.constant 0 : index
    %c0_33 = arith.constant 0 : index
    %54 = vector.load %arg6[%c0_32, %c0_33] : memref<16x32xf32, #tpu.memory_space<vmem>>, vector<16x32xf32>
    tpu.vector_store %arg6[%c0_32, %c0_33], %53 {strides = array<i32>} : memref<16x32xf32, #tpu.memory_space<vmem>>, vector<16x32xf32>,
    return
  }
  func.func @transform_0(%arg0: i32, %arg1: i32) -> (i32, i32) {
    %c0_i32 = arith.constant 0 : i32
    %c0_i32_0 = arith.constant 0 : i32
    return %arg0, %c0_i32 : i32, i32
  }
  func.func @transform_1(%arg0: i32, %arg1: i32) -> (i32, i32) {
    %c0_i32 = arith.constant 0 : i32
    %c0_i32_0 = arith.constant 0 : i32
    return %c0_i32, %arg1 : i32, i32
  }
  func.func @transform_2(%arg0: i32, %arg1: i32) -> (i32, i32) {
    %c0_i32 = arith.constant 0 : i32
    %c0_i32_0 = arith.constant 0 : i32
    return %c0_i32, %arg1 : i32, i32
  }
  func.func @transform_3(%arg0: i32, %arg1: i32) -> (i32, i32) {
    %c0_i32 = arith.constant 0 : i32
    %c0_i32_0 = arith.constant 0 : i32
    return %arg1, %c0_i32 : i32, i32
  }
  func.func @transform_4(%arg0: i32, %arg1: i32) -> (i32, i32) {
    %c0_i32 = arith.constant 0 : i32
    %c0_i32_0 = arith.constant 0 : i32
    return %arg0, %c0_i32 : i32, i32
  }
}

</mosaic_0001>

<llo_original>
// kernel: parallel_mlp_forward.1
$region0: #{parallel_mlp_forward.1}
  #allocation0 [shape = 'u32[]', space=smem, size = 0x4, offset = 0x4, fixed_abs, tag = 'smem constant byte address 0x4 - core index']
  #allocation1 [shape = 'u32[144,128]{1,0:T(1,128)}', space=vmem, size = 0x12000, scoped, tag = 'internal scratch']
  %s0 = inlined_call_operand.vmem [shape: f32[16,32], index: 0, kind: input, shape index: {}]
  %s1 = inlined_call_operand.vmem [shape: bf16[32,256], index: 1, kind: input, shape index: {}]
  %s2 = inlined_call_operand.vmem [shape: f32[1,256], index: 2, kind: input, shape index: {}]
  %s3 = inlined_call_operand.vmem [shape: bf16[256,32], index: 3, kind: input, shape index: {}]
  %s4 = inlined_call_operand.hbm [shape: f32[16,32], index: 4, kind: output, shape index: {}]
  %s5 = sld [smem:[#allocation0]]
  $region30: #{parallel_mlp_forward.1} parent=0
    _
  %s7 = ssub.s32 1, %s5
  %s8 = scalar_select 0, %s7, %s5
  $region1: #{parallel_mlp_forward.1} parent=0
    #allocation2 [shape = 'u8[8192]{0}', space=vmem, size = 0x2000, scoped, tag = 'output window, operand 0, single buffered']
    #allocation3 [shape = 's32[1]{0}', space=sflag, size = 0x4, scoped, tag = 'scoped memory for parallel_mlp_forward.1']
    %9 = vsyncpa [#allocation3], 0
    // Predicated region
    $region2: #{parallel_mlp_forward.1} parent=1 // pred_check
      _
    $region3: #{parallel_mlp_forward.1} parent=1 // pred_check_branch
      %11 = sbr.rel (0) target = $region5
    $region4: #{parallel_mlp_forward.1} parent=1 // pred_region
      _
    $region5: #{parallel_mlp_forward.1} parent=1 // pred_fallthru
      _
    // Predicated region
    $region6: #{parallel_mlp_forward.1} parent=1 // pred_check
      _
    $region7: #{parallel_mlp_forward.1} parent=1 // pred_check_branch
      %13 = sbr.rel (0) target = $region9
    $region8: #{parallel_mlp_forward.1} parent=1 // pred_region
      _
    $region9: #{parallel_mlp_forward.1} parent=1 // pred_fallthru
      _
    // Predicated region
    $region10: #{parallel_mlp_forward.1} parent=1 // pred_check
      _
    $region11: #{parallel_mlp_forward.1} parent=1 // pred_check_branch
      %15 = sbr.rel (0) target = $region13
    $region12: #{parallel_mlp_forward.1} parent=1 // pred_region
      _
    $region13: #{parallel_mlp_forward.1} parent=1 // pred_fallthru
      _
    // Predicated region
    $region14: #{parallel_mlp_forward.1} parent=1 // pred_check
      _
    $region15: #{parallel_mlp_forward.1} parent=1 // pred_check_branch
      %17 = sbr.rel (0) target = $region17
    $region16: #{parallel_mlp_forward.1} parent=1 // pred_region
      _
    $region17: #{parallel_mlp_forward.1} parent=1 // pred_fallthru
      _
    %p19 = scmp.eq.s32.totalorder 0, 0
    // Predicated region
    $region18: #{parallel_mlp_forward.1} parent=1 // pred_check
      %p20 = pneg %p19
    $region19: #{parallel_mlp_forward.1} parent=1 // pred_check_branch
      %22 = sbr.rel (%p20) target = $region21
    $region20: #{parallel_mlp_forward.1} parent=1 // pred_region
      %vm23 = vcmask 261120
      %24 = vst.msk [vmem:[#allocation2] sm:$0xff] %vm23, 0.0
      %25 = vst.msk [vmem:[#allocation2 + $0x8] sm:$0xff] %vm23, 0.0
    $region21: #{parallel_mlp_forward.1} parent=1 // pred_fallthru
      _
    %v26 = vld [vmem:[%s0] sm:$0xff]
    %v27 = vld [vmem:[%s0 + $0x8] sm:$0xff]
    %v28 = vpack.c.bf16 %v27, %v26
    %v29 = vld [vmem:[%s1] sm:$0xf]
    %v30 = vld [vmem:[%s1 + $0x8] sm:$0xf]
    %v31 = vld [vmem:[%s1 + $0x10] sm:$0xf]
    %v32 = vld [vmem:[%s1 + $0x18] sm:$0xf]
    %v33 = vld [vmem:[%s2] sm:$0x1]
    %v35 = vlaneseq
    %v36 = vshrl.u32 %v35, 7
    %v37 = vsub.s32 0, %v36
    %v38 = vrot.slane %v33, %v37
    %v44 = vunpack.c.l.b16 %v29
    %v45 = vunpack.c.l.b16 %v30
    %v46 = vunpack.c.l.b16 %v31
    %v47 = vunpack.c.l.b16 %v32
    %v48 = vpack.c.b16 %v45, %v44
    %v49 = vpack.c.b16 %v47, %v46
    %vm52 = vcmask 261120
    %v54 = vsel %vm52, %v28, 0
    %56 = vmatprep.subr.bf16.mxu0 0
    %57 = vmatpush1.bf16.msra.mxu0 %v48
    %58 = vmatprep.subr.bf16.mxu0 0
    %59 = vmatpush1.bf16.msra.mxu0 %v49
    %60 = vmatprep.subr.bf16.mxu0 0
    %61 = vmatpush1.bf16.msra.mxu0 0
    %62 = vmatprep.subr.bf16.mxu0 0
    %63 = vmatpush1.bf16.msra.mxu0 0
    %64 = vmatprep.subr.bf16.mxu0 0
    %65 = vmatpush1.bf16.msra.mxu0 0
    %66 = vmatprep.subr.bf16.mxu0 0
    %67 = vmatpush1.bf16.msra.mxu0 0
    %68 = vmatprep.subr.bf16.mxu0 0
    %69 = vmatpush1.bf16.msra.mxu0 0
    %70 = vmatprep.subr.bf16.mxu0 0
    %71 = vmatpush1.bf16.msra.mxu0 0
    %72 = vmatprep.subr.bf16.mxu0 0
    %73 = vmatpush1.bf16.msra.mxu0 0
    %74 = vmatprep.subr.bf16.mxu0 0
    %75 = vmatpush1.bf16.msra.mxu0 0
    %76 = vmatprep.subr.bf16.mxu0 0
    %77 = vmatpush1.bf16.msra.mxu0 0
    %78 = vmatprep.subr.bf16.mxu0 0
    %79 = vmatpush1.bf16.msra.mxu0 0
    %80 = vmatprep.subr.bf16.mxu0 0
    %81 = vmatpush1.bf16.msra.mxu0 0
    %82 = vmatprep.subr.bf16.mxu0 0
    %83 = vmatpush1.bf16.msra.mxu0 0
    %84 = vmatprep.subr.bf16.mxu0 0
    %85 = vmatpush1.bf16.msra.mxu0 0
    %86 = vmatprep.subr.bf16.mxu0 0
    %87 = vmatpush1.bf16.msra.mxu0 0
    %88 = vmatprep.mubr.bf16.mxu0 0
    %89 = vmatmul.mubr.bf16.gmra.mrb[0].mxu0 %v54
    %v90 = vpop.f32.mrb[0].mxu0
    %v91 = vadd.f32 %v38, %v90
    %v92 = vpop.f32.mrb[0].mxu0
    %v93 = vpop.f32.mrb[0].mxu0
    %v94 = vadd.f32 %v38, %v93
    %v95 = vpop.f32.mrb[0].mxu0
    %96 = vdwg.mxu0
    %v97 = vmul.f32 %v91, 0.5
    %v98 = vmul.f32 %v94, 0.5
    %v99 = vmul.f32 %v91, 0.7978846
    %v100 = vmul.f32 %v94, 0.7978846
    %v101 = vmul.f32 %v91, 0.044715
    %v102 = vmul.f32 %v94, 0.044715
    %v103 = vmul.f32 %v101, %v91
    %v104 = vmul.f32 %v102, %v94
    %v105 = vadd.f32 %v103, 1.0
    %v106 = vadd.f32 %v104, 1.0
    %v107 = vmul.f32 %v99, %v105
    %v108 = vmul.f32 %v100, %v106
    %v109 = vtanh.pop %v107
    %v110 = vtanh.pop %v108
    %v111 = vadd.f32 %v109, 1.0
    %v112 = vadd.f32 %v110, 1.0
    %v113 = vmul.f32 %v97, %v111
    %v114 = vmul.f32 %v98, %v112
    %v115 = vld [vmem:[#allocation2] sm:$0xff]
    %v116 = vld [vmem:[#allocation2 + $0x8] sm:$0xff]
    %v117 = vpack.c.bf16 %v114, %v113
    %v118 = vld [vmem:[%s3] sm:$0xf]
    %v119 = vld [vmem:[%s3 + $0x4] sm:$0xf]
    %v120 = vld [vmem:[%s3 + $0x8] sm:$0xf]
    %v121 = vld [vmem:[%s3 + $0xc] sm:$0xf]
    %v122 = vld [vmem:[%s3 + $0x10] sm:$0xf]
    %v123 = vld [vmem:[%s3 + $0x14] sm:$0xf]
    %v124 = vld [vmem:[%s3 + $0x18] sm:$0xf]
    %v125 = vld [vmem:[%s3 + $0x1c] sm:$0xf]
    %v126 = vld [vmem:[%s3 + $0x20] sm:$0xf]
    %v127 = vld [vmem:[%s3 + $0x24] sm:$0xf]
    %v128 = vld [vmem:[%s3 + $0x28] sm:$0xf]
    %v129 = vld [vmem:[%s3 + $0x2c] sm:$0xf]
    %v130 = vld [vmem:[%s3 + $0x30] sm:$0xf]
    %v131 = vld [vmem:[%s3 + $0x34] sm:$0xf]
    %v132 = vld [vmem:[%s3 + $0x38] sm:$0xf]
    %v133 = vld [vmem:[%s3 + $0x3c] sm:$0xf]
    %v150 = vunpack.c.l.b16 %v118
    %v151 = vunpack.c.l.b16 %v119
    %v152 = vunpack.c.l.b16 %v120
    %v153 = vunpack.c.l.b16 %v121
    %v154 = vunpack.c.l.b16 %v122
    %v155 = vunpack.c.l.b16 %v123
    %v156 = vunpack.c.l.b16 %v124
    %v157 = vunpack.c.l.b16 %v125
    %v158 = vunpack.c.l.b16 %v126
    %v159 = vunpack.c.l.b16 %v127
    %v160 = vunpack.c.l.b16 %v128
    %v161 = vunpack.c.l.b16 %v129
    %v162 = vunpack.c.l.b16 %v130
    %v163 = vunpack.c.l.b16 %v131
    %v164 = vunpack.c.l.b16 %v132
    %v165 = vunpack.c.l.b16 %v133
    %v166 = vpack.c.b16 %v151, %v150
    %v167 = vpack.c.b16 %v153, %v152
    %v168 = vpack.c.b16 %v155, %v154
    %v169 = vpack.c.b16 %v157, %v156
    %v170 = vpack.c.b16 %v159, %v158
    %v171 = vpack.c.b16 %v161, %v160
    %v172 = vpack.c.b16 %v163, %v162
    %v173 = vpack.c.b16 %v165, %v164
    %182 = vmatprep.subr.bf16.mxu0 0
    %183 = vmatpush1.bf16.msra.mxu0 %v166
    %184 = vmatprep.subr.bf16.mxu0 0
    %185 = vmatpush1.bf16.msra.mxu0 %v167
    %186 = vmatprep.subr.bf16.mxu0 0
    %187 = vmatpush1.bf16.msra.mxu0 %v168
    %188 = vmatprep.subr.bf16.mxu0 0
    %189 = vmatpush1.bf16.msra.mxu0 %v169
    %190 = vmatprep.subr.bf16.mxu0 0
    %191 = vmatpush1.bf16.msra.mxu0 %v170
    %192 = vmatprep.subr.bf16.mxu0 0
    %193 = vmatpush1.bf16.msra.mxu0 %v171
    %194 = vmatprep.subr.bf16.mxu0 0
    %195 = vmatpush1.bf16.msra.mxu0 %v172
    %196 = vmatprep.subr.bf16.mxu0 0
    %197 = vmatpush1.bf16.msra.mxu0 %v173
    %198 = vmatprep.subr.bf16.mxu0 0
    %199 = vmatpush1.bf16.msra.mxu0 0
    %200 = vmatprep.subr.bf16.mxu0 0
    %201 = vmatpush1.bf16.msra.mxu0 0
    %202 = vmatprep.subr.bf16.mxu0 0
    %203 = vmatpush1.bf16.msra.mxu0 0
    %204 = vmatprep.subr.bf16.mxu0 0
    %205 = vmatpush1.bf16.msra.mxu0 0
    %206 = vmatprep.subr.bf16.mxu0 0
    %207 = vmatpush1.bf16.msra.mxu0 0
    %208 = vmatprep.subr.bf16.mxu0 0
    %209 = vmatpush1.bf16.msra.mxu0 0
    %210 = vmatprep.subr.bf16.mxu0 0
    %211 = vmatpush1.bf16.msra.mxu0 0
    %212 = vmatprep.subr.bf16.mxu0 0
    %213 = vmatpush1.bf16.msra.mxu0 0
    %214 = vmatprep.mubr.bf16.mxu0 0
    %215 = vmatmul.mubr.bf16.gmra.mrb[0].mxu0 %v117
    %v216 = vpop.f32.mrb[0].mxu0
    %v217 = vadd.f32 0.0, %v216
    %v218 = vpop.f32.mrb[0].mxu0
    %v219 = vpop.f32.mrb[0].mxu0
    %v220 = vadd.f32 0.0, %v219
    %v221 = vpop.f32.mrb[0].mxu0
    %222 = vdwg.mxu0
    %v223 = vadd.f32 %v115, %v217
    %v224 = vadd.f32 %v116, %v220
    %225 = vst.msk [vmem:[#allocation2] sm:$0xff] %vm52, %v223
    %226 = vst.msk [vmem:[#allocation2 + $0x8] sm:$0xff] %vm52, %v224
    %v227 = vld [vmem:[%s1 + $0x4] sm:$0xf]
    %v228 = vld [vmem:[%s1 + $0xc] sm:$0xf]
    %v229 = vld [vmem:[%s1 + $0x14] sm:$0xf]
    %v230 = vld [vmem:[%s1 + $0x1c] sm:$0xf]
    %v231 = vld [vmem:[%s2 + $0x1] sm:$0x1]
    %v233 = vlaneseq
    %v234 = vshrl.u32 %v233, 7
    %v235 = vsub.s32 0, %v234
    %v236 = vrot.slane %v231, %v235
    %v242 = vunpack.c.l.b16 %v227
    %v243 = vunpack.c.l.b16 %v228
    %v244 = vunpack.c.l.b16 %v229
    %v245 = vunpack.c.l.b16 %v230
    %v246 = vpack.c.b16 %v243, %v242
    %v247 = vpack.c.b16 %v245, %v244
    %250 = vmatprep.subr.bf16.mxu0 0
    %251 = vmatpush1.bf16.msra.mxu0 %v246
    %252 = vmatprep.subr.bf16.mxu0 0
    %253 = vmatpush1.bf16.msra.mxu0 %v247
    %254 = vmatprep.subr.bf16.mxu0 0
    %255 = vmatpush1.bf16.msra.mxu0 0
    %256 = vmatprep.subr.bf16.mxu0 0
    %257 = vmatpush1.bf16.msra.mxu0 0
    %258 = vmatprep.subr.bf16.mxu0 0
    %259 = vmatpush1.bf16.msra.mxu0 0
    %260 = vmatprep.subr.bf16.mxu0 0
    %261 = vmatpush1.bf16.msra.mxu0 0
    %262 = vmatprep.subr.bf16.mxu0 0
    %263 = vmatpush1.bf16.msra.mxu0 0
    %264 = vmatprep.subr.bf16.mxu0 0
    %265 = vmatpush1.bf16.msra.mxu0 0
    %266 = vmatprep.subr.bf16.mxu0 0
    %267 = vmatpush1.bf16.msra.mxu0 0
    %268 = vmatprep.subr.bf16.mxu0 0
    %269 = vmatpush1.bf16.msra.mxu0 0
    %270 = vmatprep.subr.bf16.mxu0 0
    %271 = vmatpush1.bf16.msra.mxu0 0
    %272 = vmatprep.subr.bf16.mxu0 0
    %273 = vmatpush1.bf16.msra.mxu0 0
    %274 = vmatprep.subr.bf16.mxu0 0
    %275 = vmatpush1.bf16.msra.mxu0 0
    %276 = vmatprep.subr.bf16.mxu0 0
    %277 = vmatpush1.bf16.msra.mxu0 0
    %278 = vmatprep.subr.bf16.mxu0 0
    %279 = vmatpush1.bf16.msra.mxu0 0
    %280 = vmatprep.subr.bf16.mxu0 0
    %281 = vmatpush1.bf16.msra.mxu0 0
    %282 = vmatprep.mubr.bf16.mxu0 0
    %283 = vmatmul.mubr.bf16.gmra.mrb[0].mxu0 %v54
    %v284 = vpop.f32.mrb[0].mxu0
    %v285 = vadd.f32 %v236, %v284
    %v286 = vpop.f32.mrb[0].mxu0
    %v287 = vpop.f32.mrb[0].mxu0
    %v288 = vadd.f32 %v236, %v287
    %v289 = vpop.f32.mrb[0].mxu0
    %290 = vdwg.mxu0
    %v291 = vmul.f32 %v285, 0.5
    %v292 = vmul.f32 %v288, 0.5
    %v293 = vmul.f32 %v285, 0.7978846
    %v294 = vmul.f32 %v288, 0.7978846
    %v295 = vmul.f32 %v285, 0.044715
    %v296 = vmul.f32 %v288, 0.044715
    %v297 = vmul.f32 %v295, %v285
    %v298 = vmul.f32 %v296, %v288
    %v299 = vadd.f32 %v297, 1.0
    %v300 = vadd.f32 %v298, 1.0
    %v301 = vmul.f32 %v293, %v299
    %v302 = vmul.f32 %v294, %v300
    %v303 = vtanh.pop %v301
    %v304 = vtanh.pop %v302
    %v305 = vadd.f32 %v303, 1.0
    %v306 = vadd.f32 %v304, 1.0
    %v307 = vmul.f32 %v291, %v305
    %v308 = vmul.f32 %v292, %v306
    %v309 = vld [vmem:[#allocation2] sm:$0xff]
    %v310 = vld [vmem:[#allocation2 + $0x8] sm:$0xff]
    %v311 = vpack.c.bf16 %v308, %v307
    %v312 = vld [vmem:[%s3 + $0x40] sm:$0xf]
    %v313 = vld [vmem:[%s3 + $0x44] sm:$0xf]
    %v314 = vld [vmem:[%s3 + $0x48] sm:$0xf]
    %v315 = vld [vmem:[%s3 + $0x4c] sm:$0xf]
    %v316 = vld [vmem:[%s3 + $0x50] sm:$0xf]
    %v317 = vld [vmem:[%s3 + $0x54] sm:$0xf]
    %v318 = vld [vmem:[%s3 + $0x58] sm:$0xf]
    %v319 = vld [vmem:[%s3 + $0x5c] sm:$0xf]
    %v320 = vld [vmem:[%s3 + $0x60] sm:$0xf]
    %v321 = vld [vmem:[%s3 + $0x64] sm:$0xf]
    %v322 = vld [vmem:[%s3 + $0x68] sm:$0xf]
    %v323 = vld [vmem:[%s3 + $0x6c] sm:$0xf]
    %v324 = vld [vmem:[%s3 + $0x70] sm:$0xf]
    %v325 = vld [vmem:[%s3 + $0x74] sm:$0xf]
    %v326 = vld [vmem:[%s3 + $0x78] sm:$0xf]
    %v327 = vld [vmem:[%s3 + $0x7c] sm:$0xf]
    %v344 = vunpack.c.l.b16 %v312
    %v345 = vunpack.c.l.b16 %v313
    %v346 = vunpack.c.l.b16 %v314
    %v347 = vunpack.c.l.b16 %v315
    %v348 = vunpack.c.l.b16 %v316
    %v349 = vunpack.c.l.b16 %v317
    %v350 = vunpack.c.l.b16 %v318
    %v351 = vunpack.c.l.b16 %v319
    %v352 = vunpack.c.l.b16 %v320
    %v353 = vunpack.c.l.b16 %v321
    %v354 = vunpack.c.l.b16 %v322
    %v355 = vunpack.c.l.b16 %v323
    %v356 = vunpack.c.l.b16 %v324
    %v357 = vunpack.c.l.b16 %v325
    %v358 = vunpack.c.l.b16 %v326
    %v359 = vunpack.c.l.b16 %v327
    %v360 = vpack.c.b16 %v345, %v344
    %v361 = vpack.c.b16 %v347, %v346
    %v362 = vpack.c.b16 %v349, %v348
    %v363 = vpack.c.b16 %v351, %v350
    %v364 = vpack.c.b16 %v353, %v352
    %v365 = vpack.c.b16 %v355, %v354
    %v366 = vpack.c.b16 %v357, %v356
    %v367 = vpack.c.b16 %v359, %v358
    %376 = vmatprep.subr.bf16.mxu0 0
    %377 = vmatpush1.bf16.msra.mxu0 %v360
    %378 = vmatprep.subr.bf16.mxu0 0
    %379 = vmatpush1.bf16.msra.mxu0 %v361
    %380 = vmatprep.subr.bf16.mxu0 0
    %381 = vmatpush1.bf16.msra.mxu0 %v362
    %382 = vmatprep.subr.bf16.mxu0 0
    %383 = vmatpush1.bf16.msra.mxu0 %v363
    %384 = vmatprep.subr.bf16.mxu0 0
    %385 = vmatpush1.bf16.msra.mxu0 %v364
    %386 = vmatprep.subr.bf16.mxu0 0
    %387 = vmatpush1.bf16.msra.mxu0 %v365
    %388 = vmatprep.subr.bf16.mxu0 0
    %389 = vmatpush1.bf16.msra.mxu0 %v366
    %390 = vmatprep.subr.bf16.mxu0 0
    %391 = vmatpush1.bf16.msra.mxu0 %v367
    %392 = vmatprep.subr.bf16.mxu0 0
    %393 = vmatpush1.bf16.msra.mxu0 0
    %394 = vmatprep.subr.bf16.mxu0 0
    %395 = vmatpush1.bf16.msra.mxu0 0
    %396 = vmatprep.subr.bf16.mxu0 0
    %397 = vmatpush1.bf16.msra.mxu0 0
    %398 = vmatprep.subr.bf16.mxu0 0
    %399 = vmatpush1.bf16.msra.mxu0 0
    %400 = vmatprep.subr.bf16.mxu0 0
    %401 = vmatpush1.bf16.msra.mxu0 0
    %402 = vmatprep.subr.bf16.mxu0 0
    %403 = vmatpush1.bf16.msra.mxu0 0
    %404 = vmatprep.subr.bf16.mxu0 0
    %405 = vmatpush1.bf16.msra.mxu0 0
    %406 = vmatprep.subr.bf16.mxu0 0
    %407 = vmatpush1.bf16.msra.mxu0 0
    %408 = vmatprep.mubr.bf16.mxu0 0
    %409 = vmatmul.mubr.bf16.gmra.mrb[0].mxu0 %v311
    %v410 = vpop.f32.mrb[0].mxu0
    %v411 = vadd.f32 0.0, %v410
    %v412 = vpop.f32.mrb[0].mxu0
    %v413 = vpop.f32.mrb[0].mxu0
    %v414 = vadd.f32 0.0, %v413
    %v415 = vpop.f32.mrb[0].mxu0
    %416 = vdwg.mxu0
    %v417 = vadd.f32 %v309, %v411
    %v418 = vadd.f32 %v310, %v414
    %419 = vst.msk [vmem:[#allocation2] sm:$0xff] %vm52, %v417
    %420 = vst.msk [vmem:[#allocation2 + $0x8] sm:$0xff] %vm52, %v418
    // Predicated region
    $region22: #{parallel_mlp_forward.1} parent=1 // pred_check
      _
    $region23: #{parallel_mlp_forward.1} parent=1 // pred_check_branch
      %422 = sbr.rel (0) target = $region25
    $region24: #{parallel_mlp_forward.1} parent=1 // pred_region
      %s424 = ssub.s32 256, 256
      %425 = vsyncadd [#allocation3], %s424
      %s426 = sshll.u32 [#allocation2], 4
      %s427 = int_to_ptr.vmem [resolvable:$true] %s426
      %432 = dma.vmem_to_hbm [thread:$0]  %s427, 256, %s4, [#allocation3], 128, 128, 8
    $region25: #{parallel_mlp_forward.1} parent=1 // pred_fallthru
      _
    // Predicated region
    $region26: #{parallel_mlp_forward.1} parent=1 // pred_check
      _
    $region27: #{parallel_mlp_forward.1} parent=1 // pred_check_branch
      %434 = sbr.rel (0) target = $region29
    $region28: #{parallel_mlp_forward.1} parent=1 // pred_region
      %435 = dma.done [#allocation3], 256
    $region29: #{parallel_mlp_forward.1} parent=1 // pred_fallthru
      _
    %436 = vsyncpa [#allocation3], 1

</llo_original>
